<compile_context>
chip_gen: v5e
topology: v5e:2x2
jax: 0.10.0
libtpu: 0.0.40
codegen_flags: <defaults>
</compile_context>

<pallas_src>
import jax
import jax.numpy as jnp
from jax import lax
from jax.experimental import pallas as pl
from jax.experimental.pallas import tpu as pltpu


def _round_up(x: int, m: int) -> int:
    return ((x + m - 1) // m) * m


def _gather_block_kernel(ids_ref, table_hbm, out_ref, staging, sem):
    """Gather T embedding rows from the HBM table via multi-outstanding row DMAs.

    ids_ref:   (N_pad,) int32 token ids in SMEM (scalar prefetch), clamped to [0, V)
    table_hbm: (V, E_pad) embedding table, left in HBM (memory_space=pl.ANY)
    out_ref:   (T, E_pad) output block in VMEM
    staging:   (T, E_pad) VMEM scratch the row DMAs land in
    sem:       (K,) DMA semaphores -> K outstanding row copies
    """
    T = out_ref.shape[0]
    K = sem.shape[0]
    base = pl.program_id(0) * T

    def row_copy(t):
        # Scalar SMEM read drives the HBM source address (data-dependent gather).
        row = ids_ref[base + t]
        return pltpu.make_async_copy(table_hbm.at[row], staging.at[t], sem.at[t % K])

    # Prologue: put K row DMAs in flight (K is a small static int).
    for t in range(K):
        row_copy(t).start()

    # Steady state: wait row t, immediately refill the pipeline with row t + K.
    def steady(t, carry):
        row_copy(t).wait()

        @pl.when(t + K < T)
        def _():
            row_copy(t + K).start()

        return carry

    lax.fori_loop(0, T, steady, None)

    # All T rows have landed; emit one lane-dense (T, E_pad) store.
    out_ref[...] = staging[...]


def token_embedding(tokens: jax.Array, emb_table: jax.Array,
                    *, block_tokens: int = 512, max_outstanding: int = 8) -> jax.Array:
    """Pallas TPU embedding lookup: returns emb_table[tokens].

    tokens:    (B, S) integer token ids
    emb_table: (V, E) float embedding table
    returns:   (B, S, E) embeddings (same dtype as emb_table)
    """
    B, S = tokens.shape
    V, E = emb_table.shape
    N = B * S

    # Clamp ids so a bad id can never become an out-of-bounds DMA.
    # (nn.Embedding would raise; here we clamp — noted semantic difference.)
    ids = jnp.clip(tokens.reshape(N).astype(jnp.int32), 0, V - 1)

    # Token block: multiple of 8 sublanes, capped by the (8-padded) token count.
    T = min(block_tokens, _round_up(N, 8))
    N_pad = _round_up(N, T)
    ids = jnp.pad(ids, (0, N_pad - N))          # padded tail gathers row 0, sliced off

    # Lane-align the embedding dim (dense stores, aligned row DMAs).
    E_pad = _round_up(E, 128)
    table = emb_table if E_pad == E else jnp.pad(emb_table, ((0, 0), (0, E_pad - E)))

    K = max(1, min(max_outstanding, T))         # outstanding row DMAs per block

    grid = (N_pad // T,)
    out = pl.pallas_call(
        _gather_block_kernel,
        out_shape=jax.ShapeDtypeStruct((N_pad, E_pad), emb_table.dtype),
        grid_spec=pltpu.PrefetchScalarGridSpec(
            num_scalar_prefetch=1,              # ids -> SMEM, drive DMA addressing
            grid=grid,
            in_specs=[
                # Table stays in HBM; rows are fetched with manual DMAs.
                pl.BlockSpec(memory_space=pl.ANY),
            ],
            out_specs=pl.BlockSpec((T, E_pad), lambda i, ids_ref: (i, 0)),
            scratch_shapes=[
                pltpu.VMEM((T, E_pad), emb_table.dtype),   # row-DMA staging buffer
                pltpu.SemaphoreType.DMA((K,)),             # K outstanding copies
            ],
        ),
        compiler_params=pltpu.CompilerParams(
            # Token blocks are independent -> shard across TensorCores on v7x.
            dimension_semantics=("parallel",),
        ),
    )(ids, table)

    return out[:N, :E].reshape(B, S, E)


if __name__ == "__main__":
    # Module hyperparameters (small, deterministic).
    vocab_size = 1000
    emb_size = 128          # lane-aligned embedding dim

    key = jax.random.PRNGKey(0)
    k_emb, k_tok = jax.random.split(key)

    # Deterministic "parameters" (nn.Embedding weight ~ N(0, 1) by default).
    emb_table = jax.random.normal(k_emb, (vocab_size, emb_size), dtype=jnp.float32)

    # Example inputs: batch=2, seq=8 token ids.
    tokens = jax.random.randint(k_tok, (2, 8), 0, vocab_size, dtype=jnp.int32)

    out = token_embedding(tokens, emb_table)
    out = jax.block_until_ready(out)

    # Correctness check against plain JAX gather (same semantics as nn.Embedding).
    ref = emb_table[tokens]
    assert out.shape == (2, 8, emb_size)
    assert jnp.array_equal(out, ref), "mismatch vs reference gather"

    print("KERNEL_OK")
</pallas_src>

<mosaic_0001>
module attributes {stable_mosaic.version = 11 : i64} {
  func.func @_gather_block_kernel(%arg0: i32, %arg1: memref<16xi32, #tpu.memory_space<smem>>, %arg2: memref<1000x128xf32, #tpu.memory_space<any>>, %arg3: memref<16x128xf32, #tpu.memory_space<vmem>>, %arg4: memref<16x128xf32, #tpu.memory_space<vmem>>, %arg5: memref<8x!tpu.dma_semaphore, #tpu.memory_space<semaphore_mem>>) attributes {dimension_semantics = [#tpu.dimension_semantics<parallel>], iteration_bounds = array<i64: 1>, scalar_prefetch = 1 : i64, scratch_operands = 2 : i64, tpu.core_type = #tpu.core_type<tc>, window_params = [{}, {transform_indices = @transform_1, window_bounds = array<i64: 16, 128>}]} {
    %c16_i32 = arith.constant 16 : i32
    %0 = arith.muli %arg0, %c16_i32 : i32
    %c0_i32 = arith.constant 0 : i32
    %1 = arith.addi %0, %c0_i32 : i32
    %2 = arith.index_cast %1 : i32 to index
    %3 = memref.load %arg1[%2] : memref<16xi32, #tpu.memory_space<smem>>
    %c0_i32_0 = arith.constant 0 : i32
    %c0_i32_1 = arith.constant 0 : i32
    %c0_i32_2 = arith.constant 0 : i32
    %4 = tpu.memref_slice %arg2[%3, %c0_i32_2] : memref<1000x128xf32, #tpu.memory_space<any>> -> memref<1x128xf32, #tpu.memory_space<any>>
    %5 = tpu.memref_squeeze %4 : memref<1x128xf32, #tpu.memory_space<any>> -> memref<128xf32, #tpu.memory_space<any>>
    %c0_i32_3 = arith.constant 0 : i32
    %6 = tpu.memref_slice %arg4[%c0_i32_0, %c0_i32_3] : memref<16x128xf32, #tpu.memory_space<vmem>> -> memref<1x128xf32, #tpu.memory_space<vmem>>
    %7 = tpu.memref_squeeze %6 : memref<1x128xf32, #tpu.memory_space<vmem>> -> memref<128xf32, #tpu.memory_space<vmem>>
    %8 = tpu.memref_slice %arg5[%c0_i32_1] : memref<8x!tpu.dma_semaphore, #tpu.memory_space<semaphore_mem>> -> memref<1x!tpu.dma_semaphore, #tpu.memory_space<semaphore_mem>>
    %9 = tpu.memref_squeeze %8 : memref<1x!tpu.dma_semaphore, #tpu.memory_space<semaphore_mem>> -> memref<!tpu.dma_semaphore, #tpu.memory_space<semaphore_mem>>
    tpu.enqueue_dma source(%5 : memref<128xf32, #tpu.memory_space<any>>) target(%7 : memref<128xf32, #tpu.memory_space<vmem>>) target_semaphore(%9 : memref<!tpu.dma_semaphore, #tpu.memory_space<semaphore_mem>>)
    %c1_i32 = arith.constant 1 : i32
    %10 = arith.addi %0, %c1_i32 : i32
    %11 = arith.index_cast %10 : i32 to index
    %12 = memref.load %arg1[%11] : memref<16xi32, #tpu.memory_space<smem>>
    %c1_i32_4 = arith.constant 1 : i32
    %c1_i32_5 = arith.constant 1 : i32
    %c0_i32_6 = arith.constant 0 : i32
    %13 = tpu.memref_slice %arg2[%12, %c0_i32_6] : memref<1000x128xf32, #tpu.memory_space<any>> -> memref<1x128xf32, #tpu.memory_space<any>>
    %14 = tpu.memref_squeeze %13 : memref<1x128xf32, #tpu.memory_space<any>> -> memref<128xf32, #tpu.memory_space<any>>
    %c0_i32_7 = arith.constant 0 : i32
    %15 = tpu.memref_slice %arg4[%c1_i32_4, %c0_i32_7] : memref<16x128xf32, #tpu.memory_space<vmem>> -> memref<1x128xf32, #tpu.memory_space<vmem>>
    %16 = tpu.memref_squeeze %15 : memref<1x128xf32, #tpu.memory_space<vmem>> -> memref<128xf32, #tpu.memory_space<vmem>>
    %17 = tpu.memref_slice %arg5[%c1_i32_5] : memref<8x!tpu.dma_semaphore, #tpu.memory_space<semaphore_mem>> -> memref<1x!tpu.dma_semaphore, #tpu.memory_space<semaphore_mem>>
    %18 = tpu.memref_squeeze %17 : memref<1x!tpu.dma_semaphore, #tpu.memory_space<semaphore_mem>> -> memref<!tpu.dma_semaphore, #tpu.memory_space<semaphore_mem>>
    tpu.enqueue_dma source(%14 : memref<128xf32, #tpu.memory_space<any>>) target(%16 : memref<128xf32, #tpu.memory_space<vmem>>) target_semaphore(%18 : memref<!tpu.dma_semaphore, #tpu.memory_space<semaphore_mem>>)
    %c2_i32 = arith.constant 2 : i32
    %19 = arith.addi %0, %c2_i32 : i32
    %20 = arith.index_cast %19 : i32 to index
    %21 = memref.load %arg1[%20] : memref<16xi32, #tpu.memory_space<smem>>
    %c2_i32_8 = arith.constant 2 : i32
    %c2_i32_9 = arith.constant 2 : i32
    %c0_i32_10 = arith.constant 0 : i32
    %22 = tpu.memref_slice %arg2[%21, %c0_i32_10] : memref<1000x128xf32, #tpu.memory_space<any>> -> memref<1x128xf32, #tpu.memory_space<any>>
    %23 = tpu.memref_squeeze %22 : memref<1x128xf32, #tpu.memory_space<any>> -> memref<128xf32, #tpu.memory_space<any>>
    %c0_i32_11 = arith.constant 0 : i32
    %24 = tpu.memref_slice %arg4[%c2_i32_8, %c0_i32_11] : memref<16x128xf32, #tpu.memory_space<vmem>> -> memref<1x128xf32, #tpu.memory_space<vmem>>
    %25 = tpu.memref_squeeze %24 : memref<1x128xf32, #tpu.memory_space<vmem>> -> memref<128xf32, #tpu.memory_space<vmem>>
    %26 = tpu.memref_slice %arg5[%c2_i32_9] : memref<8x!tpu.dma_semaphore, #tpu.memory_space<semaphore_mem>> -> memref<1x!tpu.dma_semaphore, #tpu.memory_space<semaphore_mem>>
    %27 = tpu.memref_squeeze %26 : memref<1x!tpu.dma_semaphore, #tpu.memory_space<semaphore_mem>> -> memref<!tpu.dma_semaphore, #tpu.memory_space<semaphore_mem>>
    tpu.enqueue_dma source(%23 : memref<128xf32, #tpu.memory_space<any>>) target(%25 : memref<128xf32, #tpu.memory_space<vmem>>) target_semaphore(%27 : memref<!tpu.dma_semaphore, #tpu.memory_space<semaphore_mem>>)
    %c3_i32 = arith.constant 3 : i32
    %28 = arith.addi %0, %c3_i32 : i32
    %29 = arith.index_cast %28 : i32 to index
    %30 = memref.load %arg1[%29] : memref<16xi32, #tpu.memory_space<smem>>
    %c3_i32_12 = arith.constant 3 : i32
    %c3_i32_13 = arith.constant 3 : i32
    %c0_i32_14 = arith.constant 0 : i32
    %31 = tpu.memref_slice %arg2[%30, %c0_i32_14] : memref<1000x128xf32, #tpu.memory_space<any>> -> memref<1x128xf32, #tpu.memory_space<any>>
    %32 = tpu.memref_squeeze %31 : memref<1x128xf32, #tpu.memory_space<any>> -> memref<128xf32, #tpu.memory_space<any>>
    %c0_i32_15 = arith.constant 0 : i32
    %33 = tpu.memref_slice %arg4[%c3_i32_12, %c0_i32_15] : memref<16x128xf32, #tpu.memory_space<vmem>> -> memref<1x128xf32, #tpu.memory_space<vmem>>
    %34 = tpu.memref_squeeze %33 : memref<1x128xf32, #tpu.memory_space<vmem>> -> memref<128xf32, #tpu.memory_space<vmem>>
    %35 = tpu.memref_slice %arg5[%c3_i32_13] : memref<8x!tpu.dma_semaphore, #tpu.memory_space<semaphore_mem>> -> memref<1x!tpu.dma_semaphore, #tpu.memory_space<semaphore_mem>>
    %36 = tpu.memref_squeeze %35 : memref<1x!tpu.dma_semaphore, #tpu.memory_space<semaphore_mem>> -> memref<!tpu.dma_semaphore, #tpu.memory_space<semaphore_mem>>
    tpu.enqueue_dma source(%32 : memref<128xf32, #tpu.memory_space<any>>) target(%34 : memref<128xf32, #tpu.memory_space<vmem>>) target_semaphore(%36 : memref<!tpu.dma_semaphore, #tpu.memory_space<semaphore_mem>>)
    %c4_i32 = arith.constant 4 : i32
    %37 = arith.addi %0, %c4_i32 : i32
    %38 = arith.index_cast %37 : i32 to index
    %39 = memref.load %arg1[%38] : memref<16xi32, #tpu.memory_space<smem>>
    %c4_i32_16 = arith.constant 4 : i32
    %c4_i32_17 = arith.constant 4 : i32
    %c0_i32_18 = arith.constant 0 : i32
    %40 = tpu.memref_slice %arg2[%39, %c0_i32_18] : memref<1000x128xf32, #tpu.memory_space<any>> -> memref<1x128xf32, #tpu.memory_space<any>>
    %41 = tpu.memref_squeeze %40 : memref<1x128xf32, #tpu.memory_space<any>> -> memref<128xf32, #tpu.memory_space<any>>
    %c0_i32_19 = arith.constant 0 : i32
    %42 = tpu.memref_slice %arg4[%c4_i32_16, %c0_i32_19] : memref<16x128xf32, #tpu.memory_space<vmem>> -> memref<1x128xf32, #tpu.memory_space<vmem>>
    %43 = tpu.memref_squeeze %42 : memref<1x128xf32, #tpu.memory_space<vmem>> -> memref<128xf32, #tpu.memory_space<vmem>>
    %44 = tpu.memref_slice %arg5[%c4_i32_17] : memref<8x!tpu.dma_semaphore, #tpu.memory_space<semaphore_mem>> -> memref<1x!tpu.dma_semaphore, #tpu.memory_space<semaphore_mem>>
    %45 = tpu.memref_squeeze %44 : memref<1x!tpu.dma_semaphore, #tpu.memory_space<semaphore_mem>> -> memref<!tpu.dma_semaphore, #tpu.memory_space<semaphore_mem>>
    tpu.enqueue_dma source(%41 : memref<128xf32, #tpu.memory_space<any>>) target(%43 : memref<128xf32, #tpu.memory_space<vmem>>) target_semaphore(%45 : memref<!tpu.dma_semaphore, #tpu.memory_space<semaphore_mem>>)
    %c5_i32 = arith.constant 5 : i32
    %46 = arith.addi %0, %c5_i32 : i32
    %47 = arith.index_cast %46 : i32 to index
    %48 = memref.load %arg1[%47] : memref<16xi32, #tpu.memory_space<smem>>
    %c5_i32_20 = arith.constant 5 : i32
    %c5_i32_21 = arith.constant 5 : i32
    %c0_i32_22 = arith.constant 0 : i32
    %49 = tpu.memref_slice %arg2[%48, %c0_i32_22] : memref<1000x128xf32, #tpu.memory_space<any>> -> memref<1x128xf32, #tpu.memory_space<any>>
    %50 = tpu.memref_squeeze %49 : memref<1x128xf32, #tpu.memory_space<any>> -> memref<128xf32, #tpu.memory_space<any>>
    %c0_i32_23 = arith.constant 0 : i32
    %51 = tpu.memref_slice %arg4[%c5_i32_20, %c0_i32_23] : memref<16x128xf32, #tpu.memory_space<vmem>> -> memref<1x128xf32, #tpu.memory_space<vmem>>
    %52 = tpu.memref_squeeze %51 : memref<1x128xf32, #tpu.memory_space<vmem>> -> memref<128xf32, #tpu.memory_space<vmem>>
    %53 = tpu.memref_slice %arg5[%c5_i32_21] : memref<8x!tpu.dma_semaphore, #tpu.memory_space<semaphore_mem>> -> memref<1x!tpu.dma_semaphore, #tpu.memory_space<semaphore_mem>>
    %54 = tpu.memref_squeeze %53 : memref<1x!tpu.dma_semaphore, #tpu.memory_space<semaphore_mem>> -> memref<!tpu.dma_semaphore, #tpu.memory_space<semaphore_mem>>
    tpu.enqueue_dma source(%50 : memref<128xf32, #tpu.memory_space<any>>) target(%52 : memref<128xf32, #tpu.memory_space<vmem>>) target_semaphore(%54 : memref<!tpu.dma_semaphore, #tpu.memory_space<semaphore_mem>>)
    %c6_i32 = arith.constant 6 : i32
    %55 = arith.addi %0, %c6_i32 : i32
    %56 = arith.index_cast %55 : i32 to index
    %57 = memref.load %arg1[%56] : memref<16xi32, #tpu.memory_space<smem>>
    %c6_i32_24 = arith.constant 6 : i32
    %c6_i32_25 = arith.constant 6 : i32
    %c0_i32_26 = arith.constant 0 : i32
    %58 = tpu.memref_slice %arg2[%57, %c0_i32_26] : memref<1000x128xf32, #tpu.memory_space<any>> -> memref<1x128xf32, #tpu.memory_space<any>>
    %59 = tpu.memref_squeeze %58 : memref<1x128xf32, #tpu.memory_space<any>> -> memref<128xf32, #tpu.memory_space<any>>
    %c0_i32_27 = arith.constant 0 : i32
    %60 = tpu.memref_slice %arg4[%c6_i32_24, %c0_i32_27] : memref<16x128xf32, #tpu.memory_space<vmem>> -> memref<1x128xf32, #tpu.memory_space<vmem>>
    %61 = tpu.memref_squeeze %60 : memref<1x128xf32, #tpu.memory_space<vmem>> -> memref<128xf32, #tpu.memory_space<vmem>>
    %62 = tpu.memref_slice %arg5[%c6_i32_25] : memref<8x!tpu.dma_semaphore, #tpu.memory_space<semaphore_mem>> -> memref<1x!tpu.dma_semaphore, #tpu.memory_space<semaphore_mem>>
    %63 = tpu.memref_squeeze %62 : memref<1x!tpu.dma_semaphore, #tpu.memory_space<semaphore_mem>> -> memref<!tpu.dma_semaphore, #tpu.memory_space<semaphore_mem>>
    tpu.enqueue_dma source(%59 : memref<128xf32, #tpu.memory_space<any>>) target(%61 : memref<128xf32, #tpu.memory_space<vmem>>) target_semaphore(%63 : memref<!tpu.dma_semaphore, #tpu.memory_space<semaphore_mem>>)
    %c7_i32 = arith.constant 7 : i32
    %64 = arith.addi %0, %c7_i32 : i32
    %65 = arith.index_cast %64 : i32 to index
    %66 = memref.load %arg1[%65] : memref<16xi32, #tpu.memory_space<smem>>
    %c7_i32_28 = arith.constant 7 : i32
    %c7_i32_29 = arith.constant 7 : i32
    %c0_i32_30 = arith.constant 0 : i32
    %67 = tpu.memref_slice %arg2[%66, %c0_i32_30] : memref<1000x128xf32, #tpu.memory_space<any>> -> memref<1x128xf32, #tpu.memory_space<any>>
    %68 = tpu.memref_squeeze %67 : memref<1x128xf32, #tpu.memory_space<any>> -> memref<128xf32, #tpu.memory_space<any>>
    %c0_i32_31 = arith.constant 0 : i32
    %69 = tpu.memref_slice %arg4[%c7_i32_28, %c0_i32_31] : memref<16x128xf32, #tpu.memory_space<vmem>> -> memref<1x128xf32, #tpu.memory_space<vmem>>
    %70 = tpu.memref_squeeze %69 : memref<1x128xf32, #tpu.memory_space<vmem>> -> memref<128xf32, #tpu.memory_space<vmem>>
    %71 = tpu.memref_slice %arg5[%c7_i32_29] : memref<8x!tpu.dma_semaphore, #tpu.memory_space<semaphore_mem>> -> memref<1x!tpu.dma_semaphore, #tpu.memory_space<semaphore_mem>>
    %72 = tpu.memref_squeeze %71 : memref<1x!tpu.dma_semaphore, #tpu.memory_space<semaphore_mem>> -> memref<!tpu.dma_semaphore, #tpu.memory_space<semaphore_mem>>
    tpu.enqueue_dma source(%68 : memref<128xf32, #tpu.memory_space<any>>) target(%70 : memref<128xf32, #tpu.memory_space<vmem>>) target_semaphore(%72 : memref<!tpu.dma_semaphore, #tpu.memory_space<semaphore_mem>>)
    %c0_i32_32 = arith.constant 0 : i32
    %c16_i32_33 = arith.constant 16 : i32
    %73 = arith.addi %c0_i32_32, %c16_i32_33 : i32
    %c1_i32_34 = arith.constant 1 : i32
    scf.for %arg6 = %c0_i32_32 to %73 step %c1_i32_34  : i32 {
      %76 = arith.addi %0, %arg6 : i32
      %77 = arith.index_cast %76 : i32 to index
      %78 = memref.load %arg1[%77] : memref<16xi32, #tpu.memory_space<smem>>
      %c8_i32 = arith.constant 8 : i32
      %c0_i32_39 = arith.constant 0 : i32
      %79 = arith.cmpi eq, %c8_i32, %c0_i32_39 : i32
      %c1_i32_40 = arith.constant 1 : i32
      %80 = arith.select %79, %c1_i32_40, %c8_i32 : i32
      %81 = arith.remsi %arg6, %80 : i32
      %c0_i32_41 = arith.constant 0 : i32
      %82 = arith.cmpi ne, %81, %c0_i32_41 : i32
      %c0_i32_42 = arith.constant 0 : i32
      %83 = arith.cmpi slt, %81, %c0_i32_42 : i32
      %c0_i32_43 = arith.constant 0 : i32
      %84 = arith.cmpi slt, %80, %c0_i32_43 : i32
      %85 = arith.xori %83, %84 : i1
      %86 = arith.andi %85, %82 : i1
      %87 = arith.addi %81, %80 : i32
      %88 = arith.select %86, %87, %81 : i32
      %c0_i32_44 = arith.constant 0 : i32
      %89 = tpu.memref_slice %arg2[%78, %c0_i32_44] : memref<1000x128xf32, #tpu.memory_space<any>> -> memref<1x128xf32, #tpu.memory_space<any>>
      %90 = tpu.memref_squeeze %89 : memref<1x128xf32, #tpu.memory_space<any>> -> memref<128xf32, #tpu.memory_space<any>>
      %c0_i32_45 = arith.constant 0 : i32
      %91 = tpu.memref_slice %arg4[%arg6, %c0_i32_45] : memref<16x128xf32, #tpu.memory_space<vmem>> -> memref<1x128xf32, #tpu.memory_space<vmem>>
      %92 = tpu.memref_squeeze %91 : memref<1x128xf32, #tpu.memory_space<vmem>> -> memref<128xf32, #tpu.memory_space<vmem>>
      %93 = tpu.memref_slice %arg5[%88] : memref<8x!tpu.dma_semaphore, #tpu.memory_space<semaphore_mem>> -> memref<1x!tpu.dma_semaphore, #tpu.memory_space<semaphore_mem>>
      %94 = tpu.memref_squeeze %93 : memref<1x!tpu.dma_semaphore, #tpu.memory_space<semaphore_mem>> -> memref<!tpu.dma_semaphore, #tpu.memory_space<semaphore_mem>>
      tpu.wait_dma2 semaphore(%94 : memref<!tpu.dma_semaphore, #tpu.memory_space<semaphore_mem>>) src(%90 : memref<128xf32, #tpu.memory_space<any>>) dst(%92 : memref<128xf32, #tpu.memory_space<vmem>>)
      %c8_i32_46 = arith.constant 8 : i32
      %95 = arith.addi %arg6, %c8_i32_46 : i32
      %c16_i32_47 = arith.constant 16 : i32
      %96 = arith.cmpi slt, %95, %c16_i32_47 : i32
      %97 = arith.extui %96 : i1 to i32
      %c0_i32_48 = arith.constant 0 : i32
      %98 = arith.cmpi ne, %97, %c0_i32_48 : i32
      scf.if %98 {
        %c8_i32_49 = arith.constant 8 : i32
        %99 = arith.addi %arg6, %c8_i32_49 : i32
        %100 = arith.addi %0, %99 : i32
        %101 = arith.index_cast %100 : i32 to index
        %102 = memref.load %arg1[%101] : memref<16xi32, #tpu.memory_space<smem>>
        %c8_i32_50 = arith.constant 8 : i32
        %c0_i32_51 = arith.constant 0 : i32
        %103 = arith.cmpi eq, %c8_i32_50, %c0_i32_51 : i32
        %c1_i32_52 = arith.constant 1 : i32
        %104 = arith.select %103, %c1_i32_52, %c8_i32_50 : i32
        %105 = arith.remsi %99, %104 : i32
        %c0_i32_53 = arith.constant 0 : i32
        %106 = arith.cmpi ne, %105, %c0_i32_53 : i32
        %c0_i32_54 = arith.constant 0 : i32
        %107 = arith.cmpi slt, %105, %c0_i32_54 : i32
        %c0_i32_55 = arith.constant 0 : i32
        %108 = arith.cmpi slt, %104, %c0_i32_55 : i32
        %109 = arith.xori %107, %108 : i1
        %110 = arith.andi %109, %106 : i1
        %111 = arith.addi %105, %104 : i32
        %112 = arith.select %110, %111, %105 : i32
        %c0_i32_56 = arith.constant 0 : i32
        %113 = tpu.memref_slice %arg2[%102, %c0_i32_56] : memref<1000x128xf32, #tpu.memory_space<any>> -> memref<1x128xf32, #tpu.memory_space<any>>
        %114 = tpu.memref_squeeze %113 : memref<1x128xf32, #tpu.memory_space<any>> -> memref<128xf32, #tpu.memory_space<any>>
        %c0_i32_57 = arith.constant 0 : i32
        %115 = tpu.memref_slice %arg4[%99, %c0_i32_57] : memref<16x128xf32, #tpu.memory_space<vmem>> -> memref<1x128xf32, #tpu.memory_space<vmem>>
        %116 = tpu.memref_squeeze %115 : memref<1x128xf32, #tpu.memory_space<vmem>> -> memref<128xf32, #tpu.memory_space<vmem>>
        %117 = tpu.memref_slice %arg5[%112] : memref<8x!tpu.dma_semaphore, #tpu.memory_space<semaphore_mem>> -> memref<1x!tpu.dma_semaphore, #tpu.memory_space<semaphore_mem>>
        %118 = tpu.memref_squeeze %117 : memref<1x!tpu.dma_semaphore, #tpu.memory_space<semaphore_mem>> -> memref<!tpu.dma_semaphore, #tpu.memory_space<semaphore_mem>>
        tpu.enqueue_dma source(%114 : memref<128xf32, #tpu.memory_space<any>>) target(%116 : memref<128xf32, #tpu.memory_space<vmem>>) target_semaphore(%118 : memref<!tpu.dma_semaphore, #tpu.memory_space<semaphore_mem>>)
      } else {
      }
    }
    %c16_i32_35 = arith.constant 16 : i32
    %c0 = arith.constant 0 : index
    %c0_36 = arith.constant 0 : index
    %74 = vector.load %arg4[%c0, %c0_36] : memref<16x128xf32, #tpu.memory_space<vmem>>, vector<16x128xf32>
    %c0_37 = arith.constant 0 : index
    %c0_38 = arith.constant 0 : index
    %75 = vector.load %arg3[%c0_37, %c0_38] : memref<16x128xf32, #tpu.memory_space<vmem>>, vector<16x128xf32>
    tpu.vector_store %arg3[%c0_37, %c0_38], %74 {strides = array<i32>} : memref<16x128xf32, #tpu.memory_space<vmem>>, vector<16x128xf32>,
    return
  }
  func.func @transform_1(%arg0: i32, %arg1: memref<16xi32, #tpu.memory_space<smem>>) -> (i32, i32) {
    %c0_i32 = arith.constant 0 : i32
    %c0_i32_0 = arith.constant 0 : i32
    return %arg0, %c0_i32 : i32, i32
  }
}

</mosaic_0001>

<llo_original>
// kernel: tpu_custom_call.1
$region0: #{tpu_custom_call.1}
  #allocation0 [shape = 'u32[]', space=smem, size = 0x4, offset = 0x4, fixed_abs, tag = 'smem constant byte address 0x4 - core index']
  #allocation1 [shape = 'u32[72,128]{1,0:T(1,128)}', space=vmem, size = 0x9000, scoped, tag = 'internal scratch']
  #allocation2 [shape = 'f32[16,128]{1,0:T(8,128)}', space=vmem, size = 0x2000, scoped, tag = 'scratch operand']
  #allocation3 [shape = 's32[8]{0}', space=sflag, size = 0x20, scoped, tag = 'scratch operand']
  #allocation4 [shape = 's32[1]{0}', space=sflag, size = 0x4, scoped, tag = 'scoped memory for tpu_custom_call.1']
  #allocation5 [shape = 'u8[512]{0}', space=smem, size = 0x200, scoped, tag = 'prefetched SMEM operand 0']
  #allocation8 [shape = 's32[]', space=sflag, size = 0x4, offset = 0, fixed_abs, tag = 'sflag constant byte address 0x0 - dummy sync flag']
  #allocation9 [shape = 's32[]', space=sflag, size = 0x4, offset = 0, fixed_abs, tag = 'sflag constant byte address 0x0 - dummy sync flag']
  #allocation10 [shape = 'u32[]', space=smem, size = 0x4, offset = 0x44, fixed_abs, tag = 'smem constant byte address 0x44 - assertion arg 0']
  #allocation11 [shape = 'u32[]', space=smem, size = 0x4, offset = 0x48, fixed_abs, tag = 'smem constant byte address 0x48 - assertion arg 1']
  #allocation12 [shape = 's32[]', space=sflag, size = 0x4, offset = 0, fixed_abs, tag = 'sflag constant byte address 0x0 - dummy sync flag']
  #allocation13 [shape = 's32[]', space=sflag, size = 0x4, offset = 0, fixed_abs, tag = 'sflag constant byte address 0x0 - dummy sync flag']
  #allocation14 [shape = 's32[]', space=sflag, size = 0x4, offset = 0, fixed_abs, tag = 'sflag constant byte address 0x0 - dummy sync flag']
  #allocation15 [shape = 's32[]', space=sflag, size = 0x4, offset = 0, fixed_abs, tag = 'sflag constant byte address 0x0 - dummy sync flag']
  #allocation16 [shape = 's32[]', space=sflag, size = 0x4, offset = 0, fixed_abs, tag = 'sflag constant byte address 0x0 - dummy sync flag']
  #allocation17 [shape = 's32[]', space=sflag, size = 0x4, offset = 0, fixed_abs, tag = 'sflag constant byte address 0x0 - dummy sync flag']
  #allocation18 [shape = 's32[]', space=sflag, size = 0x4, offset = 0, fixed_abs, tag = 'sflag constant byte address 0x0 - dummy sync flag']
  #allocation19 [shape = 's32[]', space=sflag, size = 0x4, offset = 0, fixed_abs, tag = 'sflag constant byte address 0x0 - dummy sync flag']
  #allocation20 [shape = 's32[]', space=sflag, size = 0x4, offset = 0, fixed_abs, tag = 'sflag constant byte address 0x0 - dummy sync flag']
  #allocation21 [shape = 's32[]', space=sflag, size = 0x4, offset = 0, fixed_abs, tag = 'sflag constant byte address 0x0 - dummy sync flag']
  #allocation22 [shape = 's32[]', space=sflag, size = 0x4, offset = 0, fixed_abs, tag = 'sflag constant byte address 0x0 - dummy sync flag']
  #allocation23 [shape = 's32[]', space=sflag, size = 0x4, offset = 0, fixed_abs, tag = 'sflag constant byte address 0x0 - dummy sync flag']
  #allocation24 [shape = 's32[]', space=sflag, size = 0x4, offset = 0, fixed_abs, tag = 'sflag constant byte address 0x0 - dummy sync flag']
  #allocation25 [shape = 's32[]', space=sflag, size = 0x4, offset = 0, fixed_abs, tag = 'sflag constant byte address 0x0 - dummy sync flag']
  #allocation26 [shape = 's32[]', space=sflag, size = 0x4, offset = 0, fixed_abs, tag = 'sflag constant byte address 0x0 - dummy sync flag']
  #allocation27 [shape = 's32[]', space=sflag, size = 0x4, offset = 0, fixed_abs, tag = 'sflag constant byte address 0x0 - dummy sync flag']
  %s0 = inlined_call_operand.hbm [shape: s32[16], index: 0, kind: input, shape index: {}]
  %s1 = inlined_call_operand.hbm [shape: f32[1000,128], index: 1, kind: input, shape index: {}]
  %s2 = inlined_call_operand.hbm [shape: f32[16,128], index: 2, kind: output, shape index: {}]
  %s3 = sld [smem:[#allocation0]]
  $region57: #{tpu_custom_call.1} parent=0
    _
  %s5 = ssub.s32 1, %s3
  %s6 = scalar_select 0, %s5, %s3
  %s8 = sshll.u32 %s0, 4
  %s9 = int_to_ptr.hbm [resolvable:$true] %s8
  %11 = dma.hbm_to_smem %s9, 16, [#allocation5], [#allocation4]
  %13 = dma.done [#allocation4], 16
  %14 = sfence
  $region1: #{tpu_custom_call.1} parent=0
    #allocation6 [shape = 'u8[8192]{0}', space=vmem, size = 0x2000, scoped, tag = 'output window, operand 0, single buffered']
    #allocation7 [shape = 's32[1]{0}', space=sflag, size = 0x4, scoped, tag = 'scoped memory for tpu_custom_call.1']
    %15 = vsyncpa [#allocation7], 0
    %s16 = smul.u32 0, 16
    %s17 = sld [smem:[#allocation5 + %s16]]
    %s18 = scalar_lea.hbm %s1, %s17
    // Predicated region
    $region2: #{tpu_custom_call.1} parent=1 // pred_check
      _
    $region3: #{tpu_custom_call.1} parent=1 // pred_check_branch
      %20 = sbr.rel target = $region5
    $region4: #{tpu_custom_call.1} parent=1 // pred_region
      %21 = sst [smem:[#allocation10]] [#allocation9]
      %22 = sst [smem:[#allocation11]] [#allocation8]
    $region5: #{tpu_custom_call.1} parent=1 // pred_fallthru
      _
    %24 = shalt.err (0)
    %s26 = sshll.u32 %s18, 4
    %s27 = int_to_ptr.hbm [resolvable:$true] %s26
    %s28 = sshll.u32 [#allocation2], 4
    %s29 = int_to_ptr.vmem [resolvable:$true] %s28
    %31 = dma.hbm_to_vmem [thread:$0]  %s27, 16, %s29, [#allocation3]
    %s32 = sadd.s32 %s16, 1
    %s33 = sld [smem:[#allocation5 + %s32]]
    %s34 = scalar_lea.hbm %s1, %s33
    %s35 = scalar_lea.vmem [#allocation2], 1
    %s36 = scalar_lea.sflag [#allocation3], 1
    // Predicated region
    $region6: #{tpu_custom_call.1} parent=1 // pred_check
      _
    $region7: #{tpu_custom_call.1} parent=1 // pred_check_branch
      %38 = sbr.rel target = $region9
    $region8: #{tpu_custom_call.1} parent=1 // pred_region
      %39 = sst [smem:[#allocation10]] [#allocation13]
      %40 = sst [smem:[#allocation11]] [#allocation12]
    $region9: #{tpu_custom_call.1} parent=1 // pred_fallthru
      _
    %42 = shalt.err (0)
    %s44 = sshll.u32 %s34, 4
    %s45 = int_to_ptr.hbm [resolvable:$true] %s44
    %s46 = sshll.u32 %s35, 4
    %s47 = int_to_ptr.vmem [resolvable:$true] %s46
    %49 = dma.hbm_to_vmem [thread:$0]  %s45, 16, %s47, %s36
    %s50 = sadd.s32 %s16, 2
    %s51 = sld [smem:[#allocation5 + %s50]]
    %s52 = scalar_lea.hbm %s1, %s51
    %s53 = scalar_lea.vmem [#allocation2], 2
    %s54 = scalar_lea.sflag [#allocation3], 2
    // Predicated region
    $region10: #{tpu_custom_call.1} parent=1 // pred_check
      _
    $region11: #{tpu_custom_call.1} parent=1 // pred_check_branch
      %56 = sbr.rel target = $region13
    $region12: #{tpu_custom_call.1} parent=1 // pred_region
      %57 = sst [smem:[#allocation10]] [#allocation15]
      %58 = sst [smem:[#allocation11]] [#allocation14]
    $region13: #{tpu_custom_call.1} parent=1 // pred_fallthru
      _
    %60 = shalt.err (0)
    %s62 = sshll.u32 %s52, 4
    %s63 = int_to_ptr.hbm [resolvable:$true] %s62
    %s64 = sshll.u32 %s53, 4
    %s65 = int_to_ptr.vmem [resolvable:$true] %s64
    %67 = dma.hbm_to_vmem [thread:$0]  %s63, 16, %s65, %s54
    %s68 = sadd.s32 %s16, 3
    %s69 = sld [smem:[#allocation5 + %s68]]
    %s70 = scalar_lea.hbm %s1, %s69
    %s71 = scalar_lea.vmem [#allocation2], 3
    %s72 = scalar_lea.sflag [#allocation3], 3
    // Predicated region
    $region14: #{tpu_custom_call.1} parent=1 // pred_check
      _
    $region15: #{tpu_custom_call.1} parent=1 // pred_check_branch
      %74 = sbr.rel target = $region17
    $region16: #{tpu_custom_call.1} parent=1 // pred_region
      %75 = sst [smem:[#allocation10]] [#allocation17]
      %76 = sst [smem:[#allocation11]] [#allocation16]
    $region17: #{tpu_custom_call.1} parent=1 // pred_fallthru
      _
    %78 = shalt.err (0)
    %s80 = sshll.u32 %s70, 4
    %s81 = int_to_ptr.hbm [resolvable:$true] %s80
    %s82 = sshll.u32 %s71, 4
    %s83 = int_to_ptr.vmem [resolvable:$true] %s82
    %85 = dma.hbm_to_vmem [thread:$0]  %s81, 16, %s83, %s72
    %s86 = sadd.s32 %s16, 4
    %s87 = sld [smem:[#allocation5 + %s86]]
    %s88 = scalar_lea.hbm %s1, %s87
    %s89 = scalar_lea.vmem [#allocation2], 4
    %s90 = scalar_lea.sflag [#allocation3], 4
    // Predicated region
    $region18: #{tpu_custom_call.1} parent=1 // pred_check
      _
    $region19: #{tpu_custom_call.1} parent=1 // pred_check_branch
      %92 = sbr.rel target = $region21
    $region20: #{tpu_custom_call.1} parent=1 // pred_region
      %93 = sst [smem:[#allocation10]] [#allocation19]
      %94 = sst [smem:[#allocation11]] [#allocation18]
    $region21: #{tpu_custom_call.1} parent=1 // pred_fallthru
      _
    %96 = shalt.err (0)
    %s98 = sshll.u32 %s88, 4
    %s99 = int_to_ptr.hbm [resolvable:$true] %s98
    %s100 = sshll.u32 %s89, 4
    %s101 = int_to_ptr.vmem [resolvable:$true] %s100
    %103 = dma.hbm_to_vmem [thread:$0]  %s99, 16, %s101, %s90
    %s104 = sadd.s32 %s16, 5
    %s105 = sld [smem:[#allocation5 + %s104]]
    %s106 = scalar_lea.hbm %s1, %s105
    %s107 = scalar_lea.vmem [#allocation2], 5
    %s108 = scalar_lea.sflag [#allocation3], 5
    // Predicated region
    $region22: #{tpu_custom_call.1} parent=1 // pred_check
      _
    $region23: #{tpu_custom_call.1} parent=1 // pred_check_branch
      %110 = sbr.rel target = $region25
    $region24: #{tpu_custom_call.1} parent=1 // pred_region
      %111 = sst [smem:[#allocation10]] [#allocation21]
      %112 = sst [smem:[#allocation11]] [#allocation20]
    $region25: #{tpu_custom_call.1} parent=1 // pred_fallthru
      _
    %114 = shalt.err (0)
    %s116 = sshll.u32 %s106, 4
    %s117 = int_to_ptr.hbm [resolvable:$true] %s116
    %s118 = sshll.u32 %s107, 4
    %s119 = int_to_ptr.vmem [resolvable:$true] %s118
    %121 = dma.hbm_to_vmem [thread:$0]  %s117, 16, %s119, %s108
    %s122 = sadd.s32 %s16, 6
    %s123 = sld [smem:[#allocation5 + %s122]]
    %s124 = scalar_lea.hbm %s1, %s123
    %s125 = scalar_lea.vmem [#allocation2], 6
    %s126 = scalar_lea.sflag [#allocation3], 6
    // Predicated region
    $region26: #{tpu_custom_call.1} parent=1 // pred_check
      _
    $region27: #{tpu_custom_call.1} parent=1 // pred_check_branch
      %128 = sbr.rel target = $region29
    $region28: #{tpu_custom_call.1} parent=1 // pred_region
      %129 = sst [smem:[#allocation10]] [#allocation23]
      %130 = sst [smem:[#allocation11]] [#allocation22]
    $region29: #{tpu_custom_call.1} parent=1 // pred_fallthru
      _
    %132 = shalt.err (0)
    %s134 = sshll.u32 %s124, 4
    %s135 = int_to_ptr.hbm [resolvable:$true] %s134
    %s136 = sshll.u32 %s125, 4
    %s137 = int_to_ptr.vmem [resolvable:$true] %s136
    %139 = dma.hbm_to_vmem [thread:$0]  %s135, 16, %s137, %s126
    %s140 = sadd.s32 %s16, 7
    %s141 = sld [smem:[#allocation5 + %s140]]
    %s142 = scalar_lea.hbm %s1, %s141
    %s143 = scalar_lea.vmem [#allocation2], 7
    %s144 = scalar_lea.sflag [#allocation3], 7
    // Predicated region
    $region30: #{tpu_custom_call.1} parent=1 // pred_check
      _
    $region31: #{tpu_custom_call.1} parent=1 // pred_check_branch
      %146 = sbr.rel target = $region33
    $region32: #{tpu_custom_call.1} parent=1 // pred_region
      %147 = sst [smem:[#allocation10]] [#allocation25]
      %148 = sst [smem:[#allocation11]] [#allocation24]
    $region33: #{tpu_custom_call.1} parent=1 // pred_fallthru
      _
    %150 = shalt.err (0)
    %s152 = sshll.u32 %s142, 4
    %s153 = int_to_ptr.hbm [resolvable:$true] %s152
    %s154 = sshll.u32 %s143, 4
    %s155 = int_to_ptr.vmem [resolvable:$true] %s154
    %157 = dma.hbm_to_vmem [thread:$0]  %s153, 16, %s155, %s144
    loop: start=0, step=1, limit=16
    $region34: #{tpu_custom_call.1} parent=1 // loop_pre_header
      _
    $region35: #{tpu_custom_call.1} parent=1 // loop_header
      %s159 = sphi 0, %s163
      %p160 = scmp.ge.s32.totalorder %s159, 16
    $region36: #{tpu_custom_call.1} parent=1 // loop_header_branch
      %162 = sbr.rel (%p160) target = $region40
    $region37: #{tpu_custom_call.1} parent=1 // loop_body
      %s164 = sadd.s32 %s16, %s159
      %s165 = sld [smem:[#allocation5 + %s164]]
      %p166 = scmp.lt.s32.totalorder %s159, 0
      %s167 = ssub.s32 0, %s159
      %s168 = scalar_select %p166, %s167, %s159
      %s169 = sand.u32 %s168, 7
      %s170 = ssub.s32 0, %s169
      %s171 = scalar_select %p166, %s170, %s169
      %p172 = scmp.ne.s32.totalorder %s171, 0
      %p173 = scmp.lt.s32.totalorder %s171, 0
      %p174 = pnand %p173, %p172
      %p175 = pneg %p174
      %s176 = sadd.s32 %s171, 8
      %s177 = scalar_select %p175, %s176, %s171
      %s178 = scalar_lea.sflag [#allocation3], %s177
      %180 = dma.done %s178, 16
      %s181 = sadd.s32 %s159, 8
      %p182 = scmp.lt.s32.totalorder %s181, 16
      // Predicated region
      $region41: #{tpu_custom_call.1} parent=37 // pred_check
        %p183 = pneg %p182
      $region42: #{tpu_custom_call.1} parent=37 // pred_check_branch
        %185 = sbr.rel (%p183) target = $region44
      $region43: #{tpu_custom_call.1} parent=37 // pred_region
        %s186 = sadd.s32 %s16, %s181
        %s187 = sld [smem:[#allocation5 + %s186]]
        %p188 = scmp.lt.s32.totalorder %s181, 0
        %s189 = ssub.s32 0, %s181
        %s190 = scalar_select %p188, %s189, %s181
        %s191 = sand.u32 %s190, 7
        %s192 = ssub.s32 0, %s191
        %s193 = scalar_select %p188, %s192, %s191
        %p194 = scmp.ne.s32.totalorder %s193, 0
        %p195 = scmp.lt.s32.totalorder %s193, 0
        %p196 = pnand %p195, %p194
        %p197 = pneg %p196
        %s198 = sadd.s32 %s193, 8
        %s199 = scalar_select %p197, %s198, %s193
        %s200 = scalar_lea.hbm %s1, %s187
        %s201 = scalar_lea.vmem [#allocation2], %s181
        %s202 = scalar_lea.sflag [#allocation3], %s199
        // Predicated region
        $region45: #{tpu_custom_call.1} parent=43 // pred_check
          _
        $region46: #{tpu_custom_call.1} parent=43 // pred_check_branch
          %204 = sbr.rel target = $region48
        $region47: #{tpu_custom_call.1} parent=43 // pred_region
          %205 = sst [smem:[#allocation10]] [#allocation27]
          %206 = sst [smem:[#allocation11]] [#allocation26]
        $region48: #{tpu_custom_call.1} parent=43 // pred_fallthru
          _
        %208 = shalt.err (0)
        %s210 = sshll.u32 %s200, 4
        %s211 = int_to_ptr.hbm [resolvable:$true] %s210
        %s212 = sshll.u32 %s201, 4
        %s213 = int_to_ptr.vmem [resolvable:$true] %s212
        %215 = dma.hbm_to_vmem [thread:$0]  %s211, 16, %s213, %s202
      $region44: #{tpu_custom_call.1} parent=37 // pred_fallthru
        _
    $region38: #{tpu_custom_call.1} parent=1 // loop_footer
      %s163 = sadd.s32 1, %s159
    $region39: #{tpu_custom_call.1} parent=1 // loop_footer_branch
      %158 = sbr.rel target = $region35
    $region40: #{tpu_custom_call.1} parent=1 // loop_exit
      _
    %v216 = vld [vmem:[#allocation2] sm:$0xff]
    %v217 = vld [vmem:[#allocation2 + $0x8] sm:$0xff]
    %218 = vst [vmem:[#allocation6] sm:$0xff] %v216
    %219 = vst [vmem:[#allocation6 + $0x8] sm:$0xff] %v217
    // Predicated region
    $region49: #{tpu_custom_call.1} parent=1 // pred_check
      _
    $region50: #{tpu_custom_call.1} parent=1 // pred_check_branch
      %221 = sbr.rel (0) target = $region52
    $region51: #{tpu_custom_call.1} parent=1 // pred_region
      %223 = vsyncadd [#allocation7], 0
      %s224 = sshll.u32 [#allocation6], 4
      %s225 = int_to_ptr.vmem [resolvable:$true] %s224
      %s226 = sshll.u32 %s2, 4
      %s227 = int_to_ptr.hbm [resolvable:$true] %s226
      %232 = dma.vmem_to_hbm [thread:$0]  %s225, 256, %s227, [#allocation7], 128, 128, 8
    $region52: #{tpu_custom_call.1} parent=1 // pred_fallthru
      _
    // Predicated region
    $region53: #{tpu_custom_call.1} parent=1 // pred_check
      _
    $region54: #{tpu_custom_call.1} parent=1 // pred_check_branch
      %234 = sbr.rel (0) target = $region56
    $region55: #{tpu_custom_call.1} parent=1 // pred_region
      %236 = dma.done [#allocation7], 256
    $region56: #{tpu_custom_call.1} parent=1 // pred_fallthru
      _
    %237 = vsyncpa [#allocation7], 1
  %238 = vsyncmov [#allocation3]
  %s239 = vpop.sfrf %238
  %p240 = scmp.eq.s32.totalorder %s239, 0
  %p241 = pneg %p240
  %243 = shalt.err (%p241)
  %s244 = scalar_lea.sflag [#allocation3], 1
  %245 = vsyncmov %s244
  %s246 = vpop.sfrf %245
  %p247 = scmp.eq.s32.totalorder %s246, 0
  %p248 = pneg %p247
  %250 = shalt.err (%p248)
  %s251 = scalar_lea.sflag [#allocation3], 2
  %252 = vsyncmov %s251
  %s253 = vpop.sfrf %252
  %p254 = scmp.eq.s32.totalorder %s253, 0
  %p255 = pneg %p254
  %257 = shalt.err (%p255)
  %s258 = scalar_lea.sflag [#allocation3], 3
  %259 = vsyncmov %s258
  %s260 = vpop.sfrf %259
  %p261 = scmp.eq.s32.totalorder %s260, 0
  %p262 = pneg %p261
  %264 = shalt.err (%p262)
  %s265 = scalar_lea.sflag [#allocation3], 4
  %266 = vsyncmov %s265
  %s267 = vpop.sfrf %266
  %p268 = scmp.eq.s32.totalorder %s267, 0
  %p269 = pneg %p268
  %271 = shalt.err (%p269)
  %s272 = scalar_lea.sflag [#allocation3], 5
  %273 = vsyncmov %s272
  %s274 = vpop.sfrf %273
  %p275 = scmp.eq.s32.totalorder %s274, 0
  %p276 = pneg %p275
  %278 = shalt.err (%p276)
  %s279 = scalar_lea.sflag [#allocation3], 6
  %280 = vsyncmov %s279
  %s281 = vpop.sfrf %280
  %p282 = scmp.eq.s32.totalorder %s281, 0
  %p283 = pneg %p282
  %285 = shalt.err (%p283)
  %s286 = scalar_lea.sflag [#allocation3], 7
  %287 = vsyncmov %s286
  %s288 = vpop.sfrf %287
  %p289 = scmp.eq.s32.totalorder %s288, 0
  %p290 = pneg %p289
  %292 = shalt.err (%p290)

</llo_original>
